<compile_context>
chip_gen: v6e
topology: v6e:2x2x1
jax: 0.10.0
libtpu: 0.0.40
codegen_flags: <defaults>
</compile_context>

<pallas_src>
import functools
import math

import jax
import jax.numpy as jnp
from jax.experimental import pallas as pl
from jax.experimental.pallas import tpu as pltpu

_MAX_BLOCK_LANES = 8192      # cap on a block's last (lane) axis, in elements
_MIN_SPLIT_BYTES = 1 << 20   # force >=2 grid blocks above this (v7x megacore)


def _add_bias_kernel(x_ref, b_ref, o_ref):
    # Pure VPU broadcast add; bias block is either (tile_r, 1) or (1, tile_l).
    o_ref[...] = x_ref[...] + b_ref[...]


def _sublane_multiple(dtype):
    itemsize = jnp.dtype(dtype).itemsize
    if itemsize >= 4:
        return 8
    if itemsize == 2:
        return 16
    return 32


def _round_down(x, m):
    return (x // m) * m


def _round_up(x, m):
    return ((x + m - 1) // m) * m


@functools.lru_cache(maxsize=1)
def _chip_config():
    """(target x-block bytes, VMEM capacity or None) for the local TPU gen."""
    target = 2 << 20                      # v5e / v6e / unknown: ~2 MiB x blocks
    try:
        kind = jax.devices()[0].device_kind.lower()
    except Exception:                     # pragma: no cover - CPU/interpret etc.
        kind = ""
    if "v7" in kind or "7x" in kind:
        target = 4 << 20                  # v7x: ~3.2 TB/s HBM -> amortize step cost
    vmem_cap = None
    try:
        vmem_cap = int(pltpu.get_tpu_info().vmem_capacity_bytes)
    except Exception:                     # best-effort; fall back to static caps
        vmem_cap = None
    return target, vmem_cap


def _pick_tiles(R, L, dtype, row_mult, target_bytes):
    """Choose (tile_r, tile_l) for a (R, L) elementwise stream.

    tile_l is a 128-multiple (or the full L), tile_r a row_mult-multiple (or the
    full R); sizes target ~target_bytes per x block, splits are balanced, and
    >=2 grid blocks are guaranteed for arrays above _MIN_SPLIT_BYTES so v7x's
    two TensorCores both stream.
    """
    itemsize = jnp.dtype(dtype).itemsize
    target_elems = max(256, target_bytes // itemsize)

    # Lane (last) axis.
    lane_cap = min(_MAX_BLOCK_LANES, max(128, _round_down(target_elems, 128)))
    if L <= lane_cap:
        tile_l = L
    else:
        nb_l = pl.cdiv(L, lane_cap)
        tile_l = _round_up(pl.cdiv(L, nb_l), 128)     # balanced, <= lane_cap

    # Row (second-to-last) axis.
    row_budget = max(1, target_elems // tile_l)
    if R <= max(row_mult, row_budget):
        tile_r = R
    else:
        base = max(row_mult, _round_down(row_budget, row_mult))
        nb_r = pl.cdiv(R, base)
        tile_r = _round_up(pl.cdiv(R, nb_r), row_mult)  # balanced, <= base

    # Megacore: guarantee >=2 blocks on a parallel axis for non-tiny arrays.
    if (R * L * itemsize > _MIN_SPLIT_BYTES
            and pl.cdiv(R, tile_r) * pl.cdiv(L, tile_l) < 2):
        if R >= 2 * row_mult:
            tile_r = _round_up(pl.cdiv(R, 2), row_mult)   # provably < R
        elif L >= 256:
            tile_l = _round_up(pl.cdiv(L, 2), 128)        # provably < L
    return tile_r, tile_l


def _tiled_add(x2, b, b_block_shape, b_index_map, tile_r, tile_l, vmem_cap):
    """x2: (R, L); b broadcasts against every (tile_r, tile_l) block of x2."""
    R, L = x2.shape
    itemsize = jnp.dtype(x2.dtype).itemsize
    grid = (pl.cdiv(R, tile_r), pl.cdiv(L, tile_l))

    # Scoped-VMEM budget: x in + out double-buffered (4x block) + bias + headroom.
    x_block_bytes = tile_r * tile_l * itemsize
    b_bytes = int(b.size) * jnp.dtype(b.dtype).itemsize
    vmem_limit = 4 * x_block_bytes + 4 * b_bytes + (4 << 20)
    vmem_limit = max(vmem_limit, 32 << 20)
    if vmem_cap:
        vmem_limit = min(vmem_limit, (3 * vmem_cap) // 4)
    vmem_limit = int(min(vmem_limit, 48 << 20))        # headroom on v7x's 64 MiB

    return pl.pallas_call(
        _add_bias_kernel,
        out_shape=jax.ShapeDtypeStruct((R, L), x2.dtype),
        grid=grid,
        in_specs=[
            pl.BlockSpec((tile_r, tile_l), lambda i, j: (i, j)),
            pl.BlockSpec(b_block_shape, b_index_map),
        ],
        out_specs=pl.BlockSpec((tile_r, tile_l), lambda i, j: (i, j)),
        compiler_params=pltpu.CompilerParams(
            dimension_semantics=("parallel", "parallel"),
            vmem_limit_bytes=vmem_limit),
    )(x2, b)


def _add_bias_2d(x, bias_vec, target_bytes, vmem_cap):
    N, C = x.shape
    sub = _sublane_multiple(x.dtype)

    if C >= 128:
        # Already lane-dense: (1, C) bias row, blocked along lanes with x.
        b = bias_vec.astype(x.dtype).reshape(1, C)
        tile_n, tile_c = _pick_tiles(N, C, x.dtype, sub, target_bytes)
        return _tiled_add(x, b, (1, tile_c), lambda i, j: (0, j),
                          tile_n, tile_c, vmem_cap)

    # C < 128: (N, C) blocks waste lanes.  If N*C is a multiple of lcm(C, 128),
    # flatten to a lane-dense (R, L) view; the bias pattern along a row has
    # period C (L % C == 0), so a pre-tiled (1, L) bias row blocked along lanes
    # matches every x block regardless of the row/lane tiling.
    base_l = (C * 128) // math.gcd(C, 128)            # lcm(C, 128)
    total = N * C
    if total % base_l == 0:
        max_mult = max(1, min(_MAX_BLOCK_LANES, total) // base_l)
        mult = 1
        for k in range(max_mult, 0, -1):              # largest k | (total/base_l)
            if (total // base_l) % k == 0:
                mult = k
                break
        L = base_l * mult
        R = total // L
        x2 = x.reshape(R, L)                          # row-major flatten: free
        b_row = jnp.tile(bias_vec.astype(x.dtype), L // C).reshape(1, L)
        tile_r, tile_l = _pick_tiles(R, L, x.dtype, sub, target_bytes)
        out = _tiled_add(x2, b_row, (1, tile_l), lambda i, j: (0, j),
                         tile_r, tile_l, vmem_cap)
        return out.reshape(N, C)

    # TODO(synk): tiny lane-unaligned case (C < 128, N*C % lcm(C,128) != 0): a
    # Pallas kernel would only issue masked partial stores here and XLA's fused
    # broadcast-add wins at this size, so use a plain jnp add (same semantics).
    return x + bias_vec.astype(x.dtype).reshape(1, C)


def _add_bias_4d(x, bias_vec, target_bytes, vmem_cap):
    N, C, H, W = x.shape
    HW = H * W
    CHW = C * HW
    sub = _sublane_multiple(x.dtype)
    bias = bias_vec.astype(x.dtype)

    if HW % 128 == 0:
        # Channel-row layout: x viewed as (N*C, HW); spatial axis is lane-dense,
        # row r -> channel r % C.  Row tiles are a multiple of lcm(sub, C) (or
        # the full R = N*C), so one (tile_r, 1) bias column is valid for every
        # block and stays resident (index_map -> (0, 0)).
        R = N * C
        x2 = x.reshape(R, HW)                          # free, row-major
        row_mult = (sub * C) // math.gcd(sub, C)       # lcm(sub, C)
        tile_r, tile_l = _pick_tiles(R, HW, x.dtype, row_mult, target_bytes)
        b_col = jnp.tile(bias, tile_r // C).reshape(tile_r, 1)
        out = _tiled_add(x2, b_col, (tile_r, 1), lambda i, j: (0, 0),
                         tile_r, tile_l, vmem_cap)
        return out.reshape(N, C, H, W)

    # Batch-row layout: x viewed as (N, C*H*W).  Lane-dense whenever C*H*W is a
    # multiple of 128 (e.g. 7x7 spatial with C % 128 == 0); otherwise only the
    # ragged tail lane block issues masked stores.  Bias along a row is bias[c]
    # repeated HW times -> a pre-tiled (1, CHW) bias row blocked along lanes.
    x2 = x.reshape(N, CHW)                             # free, row-major
    b_row = jnp.repeat(bias, HW).reshape(1, CHW)
    tile_r, tile_l = _pick_tiles(N, CHW, x.dtype, sub, target_bytes)
    out = _tiled_add(x2, b_row, (1, tile_l), lambda i, j: (0, j),
                     tile_r, tile_l, vmem_cap)
    return out.reshape(N, C, H, W)


def add_bias(x, bias_param, *, target_block_bytes=None):
    """AddBias forward. bias_param: (C, 1), as nn.Parameter(bias.unsqueeze(1))."""
    bias_vec = jnp.reshape(bias_param, (-1,))
    chip_target, vmem_cap = _chip_config()
    target = chip_target if target_block_bytes is None else int(target_block_bytes)
    if x.ndim == 2:
        return _add_bias_2d(x, bias_vec, target, vmem_cap)
    if x.ndim == 4:
        return _add_bias_4d(x, bias_vec, target, vmem_cap)
    raise ValueError(f"AddBias expects 2-D or 4-D input, got ndim={x.ndim}")


if __name__ == "__main__":
    key = jax.random.PRNGKey(0)
    keys = jax.random.split(key, 8)

    C = 4
    # Deterministic "checkpoint": bias (C,), stored as (C, 1) exactly like
    # nn.Parameter(bias.unsqueeze(1)).
    bias_vec = jax.random.normal(keys[0], (C,), dtype=jnp.float32)
    bias_param = bias_vec[:, None]                     # (C, 1)

    # 1) 4-D NCHW, lane-dense channel-row path (HW % 128 == 0).
    x4 = jax.random.normal(keys[1], (2, C, 16, 16), dtype=jnp.float32)
    y4 = jax.block_until_ready(add_bias(x4, bias_param))
    assert y4.shape == x4.shape and y4.dtype == x4.dtype
    assert jnp.allclose(y4, x4 + bias_vec.reshape(1, C, 1, 1), atol=1e-6), \
        "4-D (channel-row) AddBias mismatch"

    # 2) 4-D NCHW, batch-row path (HW % 128 != 0) with a ragged lane tile.
    bias8 = jax.random.normal(keys[2], (8,), dtype=jnp.float32)
    x4b = jax.random.normal(keys[3], (2, 8, 7, 7), dtype=jnp.float32)
    y4b = jax.block_until_ready(
        add_bias(x4b, bias8[:, None], target_block_bytes=1024))
    assert jnp.allclose(y4b, x4b + bias8.reshape(1, 8, 1, 1), atol=1e-6), \
        "4-D (batch-row, ragged lanes) AddBias mismatch"

    # 3) 4-D with ragged row blocks (R % tile_r != 0) via a tiny forced target.
    x4c = jax.random.normal(keys[4], (3, C, 16, 16), dtype=jnp.float32)
    y4c = jax.block_until_ready(
        add_bias(x4c, bias_param, target_block_bytes=8192))
    assert jnp.allclose(y4c, x4c + bias_vec.reshape(1, C, 1, 1), atol=1e-6), \
        "4-D (ragged rows) AddBias mismatch"

    # 4) 4-D bf16 (dtype-aware sublane packing; add runs in bf16 like x.dtype).
    x4d = jax.random.normal(keys[5], (2, C, 16, 16), dtype=jnp.bfloat16)
    y4d = jax.block_until_ready(add_bias(x4d, bias_param))
    ref4d = x4d + bias_vec.astype(jnp.bfloat16).reshape(1, C, 1, 1)
    assert y4d.dtype == jnp.bfloat16
    assert jnp.allclose(y4d.astype(jnp.float32), ref4d.astype(jnp.float32),
                        atol=1e-2), "4-D bf16 AddBias mismatch"

    # 5) 2-D (N, C), C < 128 with N*C lane-alignable -> flattened lane-dense path.
    x2a = jax.random.normal(keys[6], (64, C), dtype=jnp.float32)
    y2a = jax.block_until_ready(add_bias(x2a, bias_param))
    assert jnp.allclose(y2a, x2a + bias_vec.reshape(1, C), atol=1e-6), \
        "2-D (lane-dense flatten) AddBias mismatch"

    # 6) 2-D tiny/unaligned (N*C % lcm(C,128) != 0) -> jnp fallback.
    x2b = jax.random.normal(keys[7], (8, C), dtype=jnp.float32)
    y2b = jax.block_until_ready(add_bias(x2b, bias_param))
    assert jnp.allclose(y2b, x2b + bias_vec.reshape(1, C), atol=1e-6), \
        "2-D (fallback) AddBias mismatch"

    # 7) 2-D with C >= 128 (already lane-dense).
    kb, kx = jax.random.split(jax.random.PRNGKey(1))
    C2 = 256
    bias2 = jax.random.normal(kb, (C2,), dtype=jnp.float32)
    x2c = jax.random.normal(kx, (16, C2), dtype=jnp.float32)
    y2c = jax.block_until_ready(add_bias(x2c, bias2[:, None]))
    assert jnp.allclose(y2c, x2c + bias2.reshape(1, C2), atol=1e-6), \
        "2-D (wide-C) AddBias mismatch"

    print("KERNEL_OK")
</pallas_src>

<mosaic_0001>
module attributes {stable_mosaic.version = 11 : i64} {
  func.func @_add_bias_kernel(%arg0: i32, %arg1: i32, %arg2: memref<8x256xf32, #tpu.memory_space<vmem>>, %arg3: memref<8x1xf32, #tpu.memory_space<vmem>>, %arg4: memref<8x256xf32, #tpu.memory_space<vmem>>) attributes {dimension_semantics = [#tpu.dimension_semantics<parallel>, #tpu.dimension_semantics<parallel>], iteration_bounds = array<i64: 1, 1>, scalar_prefetch = 0 : i64, scratch_operands = 0 : i64, tpu.core_type = #tpu.core_type<tc>, window_params = [{transform_indices = @transform_0, window_bounds = array<i64: 8, 256>}, {pipeline_mode = #tpu.pipeline_mode<synchronous>, transform_indices = @transform_1, window_bounds = array<i64: 8, 1>}, {transform_indices = @transform_2, window_bounds = array<i64: 8, 256>}]} {
    %c0 = arith.constant 0 : index
    %c0_0 = arith.constant 0 : index
    %0 = vector.load %arg2[%c0, %c0_0] : memref<8x256xf32, #tpu.memory_space<vmem>>, vector<8x256xf32>
    %c0_1 = arith.constant 0 : index
    %c0_2 = arith.constant 0 : index
    %1 = vector.load %arg3[%c0_1, %c0_2] : memref<8x1xf32, #tpu.memory_space<vmem>>, vector<8x1xf32>
    %2 = vector.broadcast %1 : vector<8x1xf32> to vector<8x256xf32>
    %3 = arith.addf %0, %2 : vector<8x256xf32>
    %c0_3 = arith.constant 0 : index
    %c0_4 = arith.constant 0 : index
    %4 = vector.load %arg4[%c0_3, %c0_4] : memref<8x256xf32, #tpu.memory_space<vmem>>, vector<8x256xf32>
    tpu.vector_store %arg4[%c0_3, %c0_4], %3 {strides = array<i32>} : memref<8x256xf32, #tpu.memory_space<vmem>>, vector<8x256xf32>,
    return
  }
  func.func @transform_0(%arg0: i32, %arg1: i32) -> (i32, i32) {
    %c0_i32 = arith.constant 0 : i32
    return %arg0, %arg1 : i32, i32
  }
  func.func @transform_1(%arg0: i32, %arg1: i32) -> (i32, i32) {
    %c0_i32 = arith.constant 0 : i32
    %c0_i32_0 = arith.constant 0 : i32
    %c0_i32_1 = arith.constant 0 : i32
    return %c0_i32, %c0_i32_0 : i32, i32
  }
  func.func @transform_2(%arg0: i32, %arg1: i32) -> (i32, i32) {
    %c0_i32 = arith.constant 0 : i32
    return %arg0, %arg1 : i32, i32
  }
}

</mosaic_0001>

<llo_original>
// kernel: tpu_custom_call.1
$region0: #{tpu_custom_call.1}
  #allocation0 [shape = 'u32[]', space=smem, size = 0x4, offset = 0x4, fixed_abs, tag = 'smem constant byte address 0x4 - core index']
  #allocation1 [shape = 'u32[144,128]{1,0:T(1,128)}', space=vmem, size = 0x12000, scoped, tag = 'internal scratch']
  %s0 = inlined_call_operand.hbm [shape: f32[8,256], index: 0, kind: input, shape index: {}]
  %s1 = inlined_call_operand.vmem [shape: f32[8,1], index: 1, kind: input, shape index: {}]
  %s2 = inlined_call_operand.hbm [shape: f32[8,256], index: 2, kind: output, shape index: {}]
  %s3 = sld [smem:[#allocation0]]
  $region22: #{tpu_custom_call.1} parent=0
    _
  %s5 = ssub.s32 1, %s3
  %s6 = scalar_select 0, %s5, %s3
  $region1: #{tpu_custom_call.1} parent=0
    #allocation2 [shape = 'u8[8192]{0}', space=vmem, size = 0x2000, scoped, tag = 'input window, operand 0, single buffered']
    #allocation3 [shape = 's32[1]{0}', space=sflag, size = 0x4, scoped, tag = 'scoped memory for tpu_custom_call.1']
    #allocation4 [shape = 's32[1]{0}', space=sflag, size = 0x4, scoped, tag = 'scoped memory for tpu_custom_call.1']
    #allocation5 [shape = 'u8[8192]{0}', space=vmem, size = 0x2000, scoped, tag = 'output window, operand 0, single buffered']
    %7 = vsyncpa [#allocation3], 0
    %8 = vsyncpa [#allocation4], 0
    // Predicated region
    $region2: #{tpu_custom_call.1} parent=1 // pred_check
      _
    $region3: #{tpu_custom_call.1} parent=1 // pred_check_branch
      %10 = sbr.rel (0) target = $region5
    $region4: #{tpu_custom_call.1} parent=1 // pred_region
      %s12 = ssub.s32 256, 256
      %13 = vsyncadd [#allocation3], %s12
      %s15 = sshll.u32 [#allocation2], 4
      %s16 = int_to_ptr.vmem [resolvable:$true] %s15
      %18 = dma.hbm_to_vmem [thread:$0]  %s0, 256, %s16, [#allocation3]
    $region5: #{tpu_custom_call.1} parent=1 // pred_fallthru
      _
    // Predicated region
    $region6: #{tpu_custom_call.1} parent=1 // pred_check
      _
    $region7: #{tpu_custom_call.1} parent=1 // pred_check_branch
      %20 = sbr.rel (0) target = $region9
    $region8: #{tpu_custom_call.1} parent=1 // pred_region
      _
    $region9: #{tpu_custom_call.1} parent=1 // pred_fallthru
      _
    // Predicated region
    $region10: #{tpu_custom_call.1} parent=1 // pred_check
      _
    $region11: #{tpu_custom_call.1} parent=1 // pred_check_branch
      %22 = sbr.rel (0) target = $region13
    $region12: #{tpu_custom_call.1} parent=1 // pred_region
      %23 = dma.done [#allocation3], 256
    $region13: #{tpu_custom_call.1} parent=1 // pred_fallthru
      _
    %v24 = vld [vmem:[#allocation2] sm:$0xff]
    %v25 = vld [vmem:[#allocation2 + $0x8] sm:$0xff]
    %v26 = vld [vmem:[%s1] sm:$0xff]
    %28 = vset.pattern.permute.xlu0 0
    %29 = vperm.xlu0 %28, %v26
    %v30 = vpop.permute.xlu0 %29
    %v32 = vadd.f32 %v24, %v30
    %v33 = vadd.f32 %v25, %v30
    %34 = vst [vmem:[#allocation5] sm:$0xff] %v32
    %35 = vst [vmem:[#allocation5 + $0x8] sm:$0xff] %v33
    // Predicated region
    $region14: #{tpu_custom_call.1} parent=1 // pred_check
      _
    $region15: #{tpu_custom_call.1} parent=1 // pred_check_branch
      %37 = sbr.rel (0) target = $region17
    $region16: #{tpu_custom_call.1} parent=1 // pred_region
      %s39 = ssub.s32 256, 256
      %40 = vsyncadd [#allocation4], %s39
      %s42 = sshll.u32 [#allocation5], 4
      %s43 = int_to_ptr.vmem [resolvable:$true] %s42
      %45 = dma.vmem_to_hbm [thread:$0]  %s43, 256, %s2, [#allocation4]
    $region17: #{tpu_custom_call.1} parent=1 // pred_fallthru
      _
    // Predicated region
    $region18: #{tpu_custom_call.1} parent=1 // pred_check
      _
    $region19: #{tpu_custom_call.1} parent=1 // pred_check_branch
      %47 = sbr.rel (0) target = $region21
    $region20: #{tpu_custom_call.1} parent=1 // pred_region
      %48 = dma.done [#allocation4], 256
    $region21: #{tpu_custom_call.1} parent=1 // pred_fallthru
      _
    %49 = vsyncpa [#allocation3], 1
    %50 = vsyncpa [#allocation4], 1

</llo_original>
